<compile_context>
chip_gen: v7x
topology: tpu7x:2x2x1
jax: 0.10.0
libtpu: 0.0.40
codegen_flags: <defaults>
</compile_context>

<pallas_src>
import jax
import jax.numpy as jnp
from jax import lax
from jax.experimental import pallas as pl
from jax.experimental.pallas import tpu as pltpu

PAD = 128          # lane-dense hidden width (hidden dims 48/32/16 zero-padded to 128)
MAX_TILE_B = 1024  # batch tile cap; working set stays a few MiB even on v7x (64 MiB VMEM)


def _leaky_relu(x, negative_slope=0.2):
    return jnp.where(x > 0, x, negative_slope * x)


def _round_up(n, m):
    return (n + m - 1) // m * m


def _choose_tile_b(batch):
    """Batch tile: multiple of 8 (lane-dense multiple of 128 when batch allows),
    capped at MAX_TILE_B, and sized so batches > 128 get >= 2 grid steps (v7x dual-TC)."""
    if batch <= 128:
        return _round_up(batch, 8)
    half = (batch + 1) // 2
    return max(128, min(MAX_TILE_B, _round_up(half, 128)))


def discriminator_kernel(x_ref,
                         w1_ref, b1_ref,
                         w2_ref, b2_ref,
                         w3_ref, b3_ref,
                         w4_ref, b4_ref,
                         out_ref):
    # One (tile_b, input_dim) batch tile:
    #   3 lane-dense MXU matmuls + VPU leaky-relu, then the single sigmoid unit computed
    #   directly in lane-packed (1, tile_b) form (A @ B^T matmul) + EUP sigmoid.
    x = x_ref[...]                                                        # (tile_b, in_dim)

    h = jnp.dot(x, w1_ref[...], preferred_element_type=jnp.float32) + b1_ref[...]
    h = _leaky_relu(h)
    # dropout1: identity (eval mode)

    h = jnp.dot(h, w2_ref[...], preferred_element_type=jnp.float32) + b2_ref[...]
    h = _leaky_relu(h)
    # dropout2: identity (eval mode)

    h = jnp.dot(h, w3_ref[...], preferred_element_type=jnp.float32) + b3_ref[...]
    h = _leaky_relu(h)
    # dropout3: identity (eval mode)

    # fc4 has a single real output column; compute it lane-packed as w4_row @ h^T.
    logits = lax.dot_general(w4_ref[...], h,
                             dimension_numbers=(((1,), (1,)), ((), ())),
                             preferred_element_type=jnp.float32)          # (1, tile_b)
    logits = logits + b4_ref[0]                                           # scalar bias (SMEM)

    out_ref[...] = jax.nn.sigmoid(logits)[None, :, :].astype(out_ref.dtype)


@jax.jit
def discriminator_forward(x, padded_params):
    """x: (batch, input_dim) float32.
    padded_params: ((w1 (in,128), b1 (1,128)), (w2 (128,128), b2), (w3 (128,128), b3),
                    (w4_row (1,128), b4 (1,)))."""
    (w1, b1), (w2, b2), (w3, b3), (w4_row, b4) = padded_params
    batch, in_dim = x.shape

    tile_b = _choose_tile_b(batch)
    grid_b = -(-batch // tile_b)          # cdiv; ragged last block is read-only & sliced off
    total_rows = grid_b * tile_b

    x_spec  = pl.BlockSpec((tile_b, in_dim), lambda i: (i, 0))   # native width, no padded copy
    w1_spec = pl.BlockSpec((in_dim, PAD), lambda i: (0, 0))      # VMEM-resident across steps
    w_spec  = pl.BlockSpec((PAD, PAD), lambda i: (0, 0))
    b_spec  = pl.BlockSpec((1, PAD), lambda i: (0, 0))
    w4_spec = pl.BlockSpec((1, PAD), lambda i: (0, 0))
    b4_spec = pl.BlockSpec(memory_space=pltpu.MemorySpace.SMEM)  # scalar bias in SMEM
    out_spec = pl.BlockSpec((1, 1, tile_b), lambda i: (i, 0, 0)) # lane-packed output row

    weight_bytes = (in_dim * PAD + 2 * PAD * PAD + PAD + 3 * PAD + 1) * 4
    cost = pl.CostEstimate(
        flops=2 * total_rows * (in_dim * PAD + 2 * PAD * PAD + PAD),
        transcendentals=total_rows,                      # one sigmoid per row
        bytes_accessed=batch * in_dim * 4                # x read (native width)
                       + total_rows * 4                  # packed output write
                       + weight_bytes,
    )

    out_packed = pl.pallas_call(
        discriminator_kernel,
        out_shape=jax.ShapeDtypeStruct((grid_b, 1, tile_b), jnp.float32),
        grid=(grid_b,),
        in_specs=[x_spec,
                  w1_spec, b_spec,
                  w_spec, b_spec,
                  w_spec, b_spec,
                  w4_spec, b4_spec],
        out_specs=out_spec,
        compiler_params=pltpu.CompilerParams(
            dimension_semantics=("parallel",)),          # v7x: shard batch tiles over 2 TCs
        cost_estimate=cost,
    )(x.astype(jnp.float32), w1, b1, w2, b2, w3, b3, w4_row, b4)

    # (grid, 1, tile_b) -> (batch, 1); trailing packed lanes of a ragged last block are dropped.
    return out_packed.reshape(-1)[:batch].reshape(batch, 1)


def _init_linear(key, in_dim, out_dim):
    """PyTorch nn.Linear default init: U(-1/sqrt(in_dim), 1/sqrt(in_dim)).
    Weight returned pre-transposed as (in, out) so each layer is x @ W + b."""
    kw, kb = jax.random.split(key)
    bound = 1.0 / (in_dim ** 0.5)
    w = jax.random.uniform(kw, (in_dim, out_dim), jnp.float32, -bound, bound)
    b = jax.random.uniform(kb, (out_dim,), jnp.float32, -bound, bound)
    return w, b


def init_discriminator_params(key, input_dim, hidden_dim1, hidden_dim2, hidden_dim3,
                              output_dim=1):
    assert output_dim == 1, "lane-packed output path assumes a single sigmoid unit"
    k1, k2, k3, k4 = jax.random.split(key, 4)
    w1, b1 = _init_linear(k1, input_dim, hidden_dim1)
    w2, b2 = _init_linear(k2, hidden_dim1, hidden_dim2)
    w3, b3 = _init_linear(k3, hidden_dim2, hidden_dim3)
    w4, b4 = _init_linear(k4, hidden_dim3, output_dim)
    raw = [(w1, b1), (w2, b2), (w3, b3), (w4, b4)]

    # Zero-padded lane-dense weights (zeros are exact no-ops through the network).
    w1p = jnp.zeros((input_dim, PAD), jnp.float32).at[:, :hidden_dim1].set(w1)
    b1p = jnp.zeros((1, PAD), jnp.float32).at[0, :hidden_dim1].set(b1)
    w2p = jnp.zeros((PAD, PAD), jnp.float32).at[:hidden_dim1, :hidden_dim2].set(w2)
    b2p = jnp.zeros((1, PAD), jnp.float32).at[0, :hidden_dim2].set(b2)
    w3p = jnp.zeros((PAD, PAD), jnp.float32).at[:hidden_dim2, :hidden_dim3].set(w3)
    b3p = jnp.zeros((1, PAD), jnp.float32).at[0, :hidden_dim3].set(b3)
    w4row = jnp.zeros((1, PAD), jnp.float32).at[0, :hidden_dim3].set(w4[:, 0])
    b4s = b4.astype(jnp.float32)              # (1,), lives in SMEM inside the kernel

    padded = ((w1p, b1p), (w2p, b2p), (w3p, b3p), (w4row, b4s))
    return raw, padded


if __name__ == "__main__":
    # Shapes consistent with the module's forward:
    # input_dim=64, hidden_dim1=48, hidden_dim2=32, hidden_dim3=16, output_dim=1
    batch = 8
    input_dim, hidden_dim1, hidden_dim2, hidden_dim3, output_dim = 64, 48, 32, 16, 1

    key = jax.random.PRNGKey(0)
    kx, kp = jax.random.split(key)

    x = jax.random.normal(kx, (batch, input_dim), jnp.float32)
    raw_params, padded_params = init_discriminator_params(
        kp, input_dim, hidden_dim1, hidden_dim2, hidden_dim3, output_dim)

    out = discriminator_forward(x, padded_params)
    out = jax.block_until_ready(out)

    # Reference check in plain JAX (same math at unpadded widths, eval-mode dropout).
    h = x
    for i, (w, b) in enumerate(raw_params):
        h = h @ w + b
        h = _leaky_relu(h) if i < 3 else jax.nn.sigmoid(h)

    assert out.shape == (batch, output_dim)
    assert jnp.allclose(out, h, atol=1e-5, rtol=1e-5)

    print("KERNEL_OK")
</pallas_src>

<mosaic_0001>
module attributes {stable_mosaic.version = 11 : i64} {
  func.func @discriminator_kernel(%arg0: i32, %arg1: memref<8x64xf32, #tpu.memory_space<vmem>>, %arg2: memref<64x128xf32, #tpu.memory_space<vmem>>, %arg3: memref<1x128xf32, #tpu.memory_space<vmem>>, %arg4: memref<128x128xf32, #tpu.memory_space<vmem>>, %arg5: memref<1x128xf32, #tpu.memory_space<vmem>>, %arg6: memref<128x128xf32, #tpu.memory_space<vmem>>, %arg7: memref<1x128xf32, #tpu.memory_space<vmem>>, %arg8: memref<1x128xf32, #tpu.memory_space<vmem>>, %arg9: memref<1xf32, #tpu.memory_space<smem>>, %arg10: memref<1x1x8xf32, #tpu.memory_space<vmem>>) attributes {dimension_semantics = [#tpu.dimension_semantics<parallel>], iteration_bounds = array<i64: 1>, scalar_prefetch = 0 : i64, scratch_operands = 0 : i64, tpu.core_type = #tpu.core_type<tc>, window_params = [{transform_indices = @transform_0, window_bounds = array<i64: 8, 64>}, {pipeline_mode = #tpu.pipeline_mode<synchronous>, transform_indices = @transform_1, window_bounds = array<i64: 64, 128>}, {pipeline_mode = #tpu.pipeline_mode<synchronous>, transform_indices = @transform_2, window_bounds = array<i64: 1, 128>}, {pipeline_mode = #tpu.pipeline_mode<synchronous>, transform_indices = @transform_3, window_bounds = array<i64: 128, 128>}, {pipeline_mode = #tpu.pipeline_mode<synchronous>, transform_indices = @transform_4, window_bounds = array<i64: 1, 128>}, {pipeline_mode = #tpu.pipeline_mode<synchronous>, transform_indices = @transform_5, window_bounds = array<i64: 128, 128>}, {pipeline_mode = #tpu.pipeline_mode<synchronous>, transform_indices = @transform_6, window_bounds = array<i64: 1, 128>}, {pipeline_mode = #tpu.pipeline_mode<synchronous>, transform_indices = @transform_7, window_bounds = array<i64: 1, 128>}, {transform_indices = @transform_8, window_bounds = array<i64: 1>}, {transform_indices = @transform_9, window_bounds = array<i64: 1, 1, 8>}]} {
    %c0 = arith.constant 0 : index
    %c0_0 = arith.constant 0 : index
    %0 = vector.load %arg1[%c0, %c0_0] : memref<8x64xf32, #tpu.memory_space<vmem>>, vector<8x64xf32>
    %c0_1 = arith.constant 0 : index
    %c0_2 = arith.constant 0 : index
    %1 = vector.load %arg2[%c0_1, %c0_2] : memref<64x128xf32, #tpu.memory_space<vmem>>, vector<64x128xf32>
    %cst = arith.constant dense<0.000000e+00> : vector<8x128xf32>
    %2 = tpu.matmul %0, %1, %cst {dimension_numbers = #tpu.dot_dimension_numbers<[1], [0], [0], [1], [0, 0, 1, 1], [], []>} : vector<8x64xf32>, vector<64x128xf32>, vector<8x128xf32> -> vector<8x128xf32>
    %c0_3 = arith.constant 0 : index
    %c0_4 = arith.constant 0 : index
    %3 = vector.load %arg3[%c0_3, %c0_4] : memref<1x128xf32, #tpu.memory_space<vmem>>, vector<1x128xf32>
    %4 = vector.broadcast %3 : vector<1x128xf32> to vector<8x128xf32>
    %5 = arith.addf %2, %4 : vector<8x128xf32>
    %cst_5 = arith.constant 0.000000e+00 : f32
    %6 = vector.broadcast %cst_5 : f32 to vector<8x128xf32>
    %7 = arith.cmpf ogt, %5, %6 : vector<8x128xf32>
    %cst_6 = arith.constant 2.000000e-01 : f32
    %8 = vector.broadcast %cst_6 : f32 to vector<8x128xf32>
    %9 = arith.mulf %8, %5 : vector<8x128xf32>
    %10 = arith.select %7, %5, %9 : vector<8x128xi1>, vector<8x128xf32>
    %c0_7 = arith.constant 0 : index
    %c0_8 = arith.constant 0 : index
    %11 = vector.load %arg4[%c0_7, %c0_8] : memref<128x128xf32, #tpu.memory_space<vmem>>, vector<128x128xf32>
    %cst_9 = arith.constant dense<0.000000e+00> : vector<8x128xf32>
    %12 = tpu.matmul %10, %11, %cst_9 {dimension_numbers = #tpu.dot_dimension_numbers<[1], [0], [0], [1], [0, 0, 1, 1], [], []>} : vector<8x128xf32>, vector<128x128xf32>, vector<8x128xf32> -> vector<8x128xf32>
    %c0_10 = arith.constant 0 : index
    %c0_11 = arith.constant 0 : index
    %13 = vector.load %arg5[%c0_10, %c0_11] : memref<1x128xf32, #tpu.memory_space<vmem>>, vector<1x128xf32>
    %14 = vector.broadcast %13 : vector<1x128xf32> to vector<8x128xf32>
    %15 = arith.addf %12, %14 : vector<8x128xf32>
    %cst_12 = arith.constant 0.000000e+00 : f32
    %16 = vector.broadcast %cst_12 : f32 to vector<8x128xf32>
    %17 = arith.cmpf ogt, %15, %16 : vector<8x128xf32>
    %cst_13 = arith.constant 2.000000e-01 : f32
    %18 = vector.broadcast %cst_13 : f32 to vector<8x128xf32>
    %19 = arith.mulf %18, %15 : vector<8x128xf32>
    %20 = arith.select %17, %15, %19 : vector<8x128xi1>, vector<8x128xf32>
    %c0_14 = arith.constant 0 : index
    %c0_15 = arith.constant 0 : index
    %21 = vector.load %arg6[%c0_14, %c0_15] : memref<128x128xf32, #tpu.memory_space<vmem>>, vector<128x128xf32>
    %cst_16 = arith.constant dense<0.000000e+00> : vector<8x128xf32>
    %22 = tpu.matmul %20, %21, %cst_16 {dimension_numbers = #tpu.dot_dimension_numbers<[1], [0], [0], [1], [0, 0, 1, 1], [], []>} : vector<8x128xf32>, vector<128x128xf32>, vector<8x128xf32> -> vector<8x128xf32>
    %c0_17 = arith.constant 0 : index
    %c0_18 = arith.constant 0 : index
    %23 = vector.load %arg7[%c0_17, %c0_18] : memref<1x128xf32, #tpu.memory_space<vmem>>, vector<1x128xf32>
    %24 = vector.broadcast %23 : vector<1x128xf32> to vector<8x128xf32>
    %25 = arith.addf %22, %24 : vector<8x128xf32>
    %cst_19 = arith.constant 0.000000e+00 : f32
    %26 = vector.broadcast %cst_19 : f32 to vector<8x128xf32>
    %27 = arith.cmpf ogt, %25, %26 : vector<8x128xf32>
    %cst_20 = arith.constant 2.000000e-01 : f32
    %28 = vector.broadcast %cst_20 : f32 to vector<8x128xf32>
    %29 = arith.mulf %28, %25 : vector<8x128xf32>
    %30 = arith.select %27, %25, %29 : vector<8x128xi1>, vector<8x128xf32>
    %c0_21 = arith.constant 0 : index
    %c0_22 = arith.constant 0 : index
    %31 = vector.load %arg8[%c0_21, %c0_22] : memref<1x128xf32, #tpu.memory_space<vmem>>, vector<1x128xf32>
    %cst_23 = arith.constant dense<0.000000e+00> : vector<1x8xf32>
    %32 = tpu.matmul %31, %30, %cst_23 {dimension_numbers = #tpu.dot_dimension_numbers<[1], [1], [0], [0], [0, 0, 1, 0], [], []>} : vector<1x128xf32>, vector<8x128xf32>, vector<1x8xf32> -> vector<1x8xf32>
    %c0_24 = arith.constant 0 : index
    %33 = memref.load %arg9[%c0_24] : memref<1xf32, #tpu.memory_space<smem>>
    %34 = vector.broadcast %33 : f32 to vector<1x8xf32>
    %35 = arith.addf %32, %34 : vector<1x8xf32>
    %36 = arith.negf %35 : vector<1x8xf32>
    %37 = math.exp %36 : vector<1x8xf32>
    %cst_25 = arith.constant 1.000000e+00 : f32
    %38 = vector.broadcast %cst_25 : f32 to vector<1x8xf32>
    %39 = arith.addf %38, %37 : vector<1x8xf32>
    %40 = arith.divf %38, %39 : vector<1x8xf32>
    %41 = vector.shape_cast %40 : vector<1x8xf32> to vector<1x1x8xf32>
    %c0_26 = arith.constant 0 : index
    %c0_27 = arith.constant 0 : index
    %c0_28 = arith.constant 0 : index
    %42 = vector.load %arg10[%c0_26, %c0_27, %c0_28] : memref<1x1x8xf32, #tpu.memory_space<vmem>>, vector<1x1x8xf32>
    tpu.vector_store %arg10[%c0_26, %c0_27, %c0_28], %41 {strides = array<i32>} : memref<1x1x8xf32, #tpu.memory_space<vmem>>, vector<1x1x8xf32>,
    return
  }
  func.func @transform_0(%arg0: i32) -> (i32, i32) {
    %c0_i32 = arith.constant 0 : i32
    %c0_i32_0 = arith.constant 0 : i32
    return %arg0, %c0_i32 : i32, i32
  }
  func.func @transform_1(%arg0: i32) -> (i32, i32) {
    %c0_i32 = arith.constant 0 : i32
    %c0_i32_0 = arith.constant 0 : i32
    %c0_i32_1 = arith.constant 0 : i32
    return %c0_i32, %c0_i32_0 : i32, i32
  }
  func.func @transform_2(%arg0: i32) -> (i32, i32) {
    %c0_i32 = arith.constant 0 : i32
    %c0_i32_0 = arith.constant 0 : i32
    %c0_i32_1 = arith.constant 0 : i32
    return %c0_i32, %c0_i32_0 : i32, i32
  }
  func.func @transform_3(%arg0: i32) -> (i32, i32) {
    %c0_i32 = arith.constant 0 : i32
    %c0_i32_0 = arith.constant 0 : i32
    %c0_i32_1 = arith.constant 0 : i32
    return %c0_i32, %c0_i32_0 : i32, i32
  }
  func.func @transform_4(%arg0: i32) -> (i32, i32) {
    %c0_i32 = arith.constant 0 : i32
    %c0_i32_0 = arith.constant 0 : i32
    %c0_i32_1 = arith.constant 0 : i32
    return %c0_i32, %c0_i32_0 : i32, i32
  }
  func.func @transform_5(%arg0: i32) -> (i32, i32) {
    %c0_i32 = arith.constant 0 : i32
    %c0_i32_0 = arith.constant 0 : i32
    %c0_i32_1 = arith.constant 0 : i32
    return %c0_i32, %c0_i32_0 : i32, i32
  }
  func.func @transform_6(%arg0: i32) -> (i32, i32) {
    %c0_i32 = arith.constant 0 : i32
    %c0_i32_0 = arith.constant 0 : i32
    %c0_i32_1 = arith.constant 0 : i32
    return %c0_i32, %c0_i32_0 : i32, i32
  }
  func.func @transform_7(%arg0: i32) -> (i32, i32) {
    %c0_i32 = arith.constant 0 : i32
    %c0_i32_0 = arith.constant 0 : i32
    %c0_i32_1 = arith.constant 0 : i32
    return %c0_i32, %c0_i32_0 : i32, i32
  }
  func.func @transform_8(%arg0: i32) -> i32 {
    %c0_i32 = arith.constant 0 : i32
    %c0_i32_0 = arith.constant 0 : i32
    return %c0_i32 : i32
  }
  func.func @transform_9(%arg0: i32) -> (i32, i32, i32) {
    %c0_i32 = arith.constant 0 : i32
    %c0_i32_0 = arith.constant 0 : i32
    %c0_i32_1 = arith.constant 0 : i32
    return %arg0, %c0_i32, %c0_i32_0 : i32, i32, i32
  }
}

</mosaic_0001>

<llo_original>
// kernel: discriminator_forward.1
$region0: #{discriminator_forward.1}
  #allocation0 [shape = 'u32[]', space=smem, size = 0x4, offset = 0x4, fixed_abs, tag = 'smem constant byte address 0x4 - core index']
  #allocation1 [shape = 'u32[144,128]{1,0:T(1,128)}', space=vmem, size = 0x12000, scoped, tag = 'internal scratch']
  #allocation2 [shape = 'f32[1]{0:T(128)S(6)}', space=smem, size = 0x200, scoped, tag = 'scoped memory for discriminator_forward.1']
  %s0 = inlined_call_operand.hbm [shape: f32[8,64], index: 0, kind: input, shape index: {}]
  %s1 = inlined_call_operand.hbm [shape: f32[64,128], index: 1, kind: input, shape index: {}]
  %s2 = inlined_call_operand.vmem [shape: f32[1,128], index: 2, kind: input, shape index: {}]
  %s3 = inlined_call_operand.hbm [shape: f32[128,128], index: 3, kind: input, shape index: {}]
  %s4 = inlined_call_operand.vmem [shape: f32[1,128], index: 4, kind: input, shape index: {}]
  %s5 = inlined_call_operand.hbm [shape: f32[128,128], index: 5, kind: input, shape index: {}]
  %s6 = inlined_call_operand.vmem [shape: f32[1,128], index: 6, kind: input, shape index: {}]
  %s7 = inlined_call_operand.vmem [shape: f32[1,128], index: 7, kind: input, shape index: {}]
  %s8 = inlined_call_operand.<no memory space> [shape: f32[1], index: 8, kind: input, shape index: {}]
  %s9 = inlined_call_operand.hbm [shape: f32[1,1,8], index: 9, kind: output, shape index: {}]
  %s10 = sld [smem:[#allocation0]]
  $region62: #{discriminator_forward.1} parent=0
    _
  %s12 = ssub.s32 1, %s10
  %s13 = scalar_select 0, %s12, %s10
  %14 = sst [smem:[#allocation2]] %s8
  $region1: #{discriminator_forward.1} parent=0
    #allocation3 [shape = 'u8[4096]{0}', space=vmem, size = 0x1000, scoped, tag = 'input window, operand 0, single buffered']
    #allocation4 [shape = 's32[1]{0}', space=sflag, size = 0x4, scoped, tag = 'scoped memory for discriminator_forward.1']
    #allocation5 [shape = 's32[1]{0}', space=sflag, size = 0x4, scoped, tag = 'scoped memory for discriminator_forward.1']
    #allocation6 [shape = 'u8[32768]{0}', space=vmem, size = 0x8000, scoped, tag = 'input window, operand 1, single buffered']
    #allocation7 [shape = 's32[1]{0}', space=sflag, size = 0x4, scoped, tag = 'scoped memory for discriminator_forward.1']
    #allocation8 [shape = 'u8[65536]{0}', space=vmem, size = 0x10000, scoped, tag = 'input window, operand 3, single buffered']
    #allocation9 [shape = 'u8[65536]{0}', space=vmem, size = 0x10000, scoped, tag = 'input window, operand 5, single buffered']
    #allocation10 [shape = 's32[1]{0}', space=sflag, size = 0x4, scoped, tag = 'scoped memory for discriminator_forward.1']
    #allocation11 [shape = 'u8[512]{0}', space=vmem, size = 0x400, scoped, tag = 'output window, operand 0, single buffered']
    %15 = vsyncpa [#allocation4], 0
    %16 = vsyncpa [#allocation7], 0
    %17 = vsyncpa [#allocation10], 0
    %18 = vsyncpa [#allocation5], 0
    // Predicated region
    $region2: #{discriminator_forward.1} parent=1 // pred_check
      _
    $region3: #{discriminator_forward.1} parent=1 // pred_check_branch
      %20 = sbr.rel (0) target = $region5
    $region4: #{discriminator_forward.1} parent=1 // pred_region
      %s22 = ssub.s32 128, 128
      %23 = vsyncadd [#allocation4], %s22
      %s25 = sshll.u32 [#allocation3], 4
      %s26 = int_to_ptr.vmem [resolvable:$true] %s25
      %28 = dma.hbm_to_vmem [thread:$0]  %s0, 128, %s26, [#allocation4]
    $region5: #{discriminator_forward.1} parent=1 // pred_fallthru
      _
    // Predicated region
    $region6: #{discriminator_forward.1} parent=1 // pred_check
      _
    $region7: #{discriminator_forward.1} parent=1 // pred_check_branch
      %30 = sbr.rel (0) target = $region9
    $region8: #{discriminator_forward.1} parent=1 // pred_region
      %s32 = ssub.s32 1024, 1024
      %33 = vsyncadd [#allocation7], %s32
      %s34 = sshll.u32 [#allocation6], 4
      %s35 = int_to_ptr.vmem [resolvable:$true] %s34
      %40 = dma.hbm_to_vmem [thread:$0]  %s1, 1024, %s35, [#allocation7], 128, 128, 8
    $region9: #{discriminator_forward.1} parent=1 // pred_fallthru
      _
    // Predicated region
    $region10: #{discriminator_forward.1} parent=1 // pred_check
      _
    $region11: #{discriminator_forward.1} parent=1 // pred_check_branch
      %42 = sbr.rel (0) target = $region13
    $region12: #{discriminator_forward.1} parent=1 // pred_region
      _
    $region13: #{discriminator_forward.1} parent=1 // pred_fallthru
      _
    // Predicated region
    $region14: #{discriminator_forward.1} parent=1 // pred_check
      _
    $region15: #{discriminator_forward.1} parent=1 // pred_check_branch
      %44 = sbr.rel (0) target = $region17
    $region16: #{discriminator_forward.1} parent=1 // pred_region
      %s46 = ssub.s32 2048, 2048
      %47 = vsyncadd [#allocation7], %s46
      %s48 = sshll.u32 [#allocation8], 4
      %s49 = int_to_ptr.vmem [resolvable:$true] %s48
      %54 = dma.hbm_to_vmem [thread:$0]  %s3, 2048, %s49, [#allocation7], 128, 128, 8
    $region17: #{discriminator_forward.1} parent=1 // pred_fallthru
      _
    // Predicated region
    $region18: #{discriminator_forward.1} parent=1 // pred_check
      _
    $region19: #{discriminator_forward.1} parent=1 // pred_check_branch
      %56 = sbr.rel (0) target = $region21
    $region20: #{discriminator_forward.1} parent=1 // pred_region
      _
    $region21: #{discriminator_forward.1} parent=1 // pred_fallthru
      _
    // Predicated region
    $region22: #{discriminator_forward.1} parent=1 // pred_check
      _
    $region23: #{discriminator_forward.1} parent=1 // pred_check_branch
      %58 = sbr.rel (0) target = $region25
    $region24: #{discriminator_forward.1} parent=1 // pred_region
      %s60 = ssub.s32 2048, 2048
      %61 = vsyncadd [#allocation10], %s60
      %s62 = sshll.u32 [#allocation9], 4
      %s63 = int_to_ptr.vmem [resolvable:$true] %s62
      %68 = dma.hbm_to_vmem [thread:$0]  %s5, 2048, %s63, [#allocation10], 128, 128, 8
    $region25: #{discriminator_forward.1} parent=1 // pred_fallthru
      _
    // Predicated region
    $region26: #{discriminator_forward.1} parent=1 // pred_check
      _
    $region27: #{discriminator_forward.1} parent=1 // pred_check_branch
      %70 = sbr.rel (0) target = $region29
    $region28: #{discriminator_forward.1} parent=1 // pred_region
      _
    $region29: #{discriminator_forward.1} parent=1 // pred_fallthru
      _
    // Predicated region
    $region30: #{discriminator_forward.1} parent=1 // pred_check
      _
    $region31: #{discriminator_forward.1} parent=1 // pred_check_branch
      %72 = sbr.rel (0) target = $region33
    $region32: #{discriminator_forward.1} parent=1 // pred_region
      _
    $region33: #{discriminator_forward.1} parent=1 // pred_fallthru
      _
    // Predicated region
    $region34: #{discriminator_forward.1} parent=1 // pred_check
      _
    $region35: #{discriminator_forward.1} parent=1 // pred_check_branch
      %74 = sbr.rel (0) target = $region37
    $region36: #{discriminator_forward.1} parent=1 // pred_region
      _
    $region37: #{discriminator_forward.1} parent=1 // pred_fallthru
      _
    // Predicated region
    $region38: #{discriminator_forward.1} parent=1 // pred_check
      _
    $region39: #{discriminator_forward.1} parent=1 // pred_check_branch
      %76 = sbr.rel (0) target = $region41
    $region40: #{discriminator_forward.1} parent=1 // pred_region
      %77 = dma.done [#allocation4], 128
    $region41: #{discriminator_forward.1} parent=1 // pred_fallthru
      _
    // Predicated region
    $region42: #{discriminator_forward.1} parent=1 // pred_check
      _
    $region43: #{discriminator_forward.1} parent=1 // pred_check_branch
      %79 = sbr.rel (0) target = $region45
    $region44: #{discriminator_forward.1} parent=1 // pred_region
      %80 = dma.done [#allocation7], 1024
    $region45: #{discriminator_forward.1} parent=1 // pred_fallthru
      _
    // Predicated region
    $region46: #{discriminator_forward.1} parent=1 // pred_check
      _
    $region47: #{discriminator_forward.1} parent=1 // pred_check_branch
      %82 = sbr.rel (0) target = $region49
    $region48: #{discriminator_forward.1} parent=1 // pred_region
      %83 = dma.done [#allocation7], 2048
    $region49: #{discriminator_forward.1} parent=1 // pred_fallthru
      _
    // Predicated region
    $region50: #{discriminator_forward.1} parent=1 // pred_check
      _
    $region51: #{discriminator_forward.1} parent=1 // pred_check_branch
      %85 = sbr.rel (0) target = $region53
    $region52: #{discriminator_forward.1} parent=1 // pred_region
      %86 = dma.done [#allocation10], 2048
    $region53: #{discriminator_forward.1} parent=1 // pred_fallthru
      _
    %v87 = vld [vmem:[#allocation3] sm:$0xff]
    %v88 = vld [vmem:[#allocation6] sm:$0xff]
    %v89 = vld [vmem:[#allocation6 + $0x8] sm:$0xff]
    %v90 = vld [vmem:[#allocation6 + $0x10] sm:$0xff]
    %v91 = vld [vmem:[#allocation6 + $0x18] sm:$0xff]
    %v92 = vld [vmem:[#allocation6 + $0x20] sm:$0xff]
    %v93 = vld [vmem:[#allocation6 + $0x28] sm:$0xff]
    %v94 = vld [vmem:[#allocation6 + $0x30] sm:$0xff]
    %v95 = vld [vmem:[#allocation6 + $0x38] sm:$0xff]
    %v96 = vld [vmem:[%s2] sm:$0x1]
    %v98 = vlaneseq
    %v99 = vshrl.u32 %v98, 7
    %v100 = vsub.s32 0, %v99
    %v101 = vrot.slane %v96, %v100
    %vm103 = vcmask 523264
    %v105 = vsel %vm103, %v87, 0
    %107 = vmatprep.subr.mxu0 0.0
    %108 = vmatpush1.msra.mxu0 %v88
    %109 = vmatprep.subr.mxu0 0.0
    %110 = vmatpush1.msra.mxu0 %v89
    %111 = vmatprep.subr.mxu0 0.0
    %112 = vmatpush1.msra.mxu0 %v90
    %113 = vmatprep.subr.mxu0 0.0
    %114 = vmatpush1.msra.mxu0 %v91
    %115 = vmatprep.subr.mxu0 0.0
    %116 = vmatpush1.msra.mxu0 %v92
    %117 = vmatprep.subr.mxu0 0.0
    %118 = vmatpush1.msra.mxu0 %v93
    %119 = vmatprep.subr.mxu0 0.0
    %120 = vmatpush1.msra.mxu0 %v94
    %121 = vmatprep.subr.mxu0 0.0
    %122 = vmatpush1.msra.mxu0 %v95
    %123 = vmatprep.subr.mxu0 0.0
    %124 = vmatpush1.msra.mxu0 0.0
    %125 = vmatprep.subr.mxu0 0.0
    %126 = vmatpush1.msra.mxu0 0.0
    %127 = vmatprep.subr.mxu0 0.0
    %128 = vmatpush1.msra.mxu0 0.0
    %129 = vmatprep.subr.mxu0 0.0
    %130 = vmatpush1.msra.mxu0 0.0
    %131 = vmatprep.subr.mxu0 0.0
    %132 = vmatpush1.msra.mxu0 0.0
    %133 = vmatprep.subr.mxu0 0.0
    %134 = vmatpush1.msra.mxu0 0.0
    %135 = vmatprep.subr.mxu0 0.0
    %136 = vmatpush1.msra.mxu0 0.0
    %137 = vmatprep.subr.mxu0 0.0
    %138 = vmatpush1.msra.mxu0 0.0
    %139 = vmatprep.subr.mxu0 0.0
    %140 = vmatpush1.msra.mxu0 0.0
    %141 = vmatprep.subr.mxu0 0.0
    %142 = vmatpush1.msra.mxu0 0.0
    %143 = vmatprep.subr.mxu0 0.0
    %144 = vmatpush1.msra.mxu0 0.0
    %145 = vmatprep.subr.mxu0 0.0
    %146 = vmatpush1.msra.mxu0 0.0
    %147 = vmatprep.subr.mxu0 0.0
    %148 = vmatpush1.msra.mxu0 0.0
    %149 = vmatprep.subr.mxu0 0.0
    %150 = vmatpush1.msra.mxu0 0.0
    %151 = vmatprep.subr.mxu0 0.0
    %152 = vmatpush1.msra.mxu0 0.0
    %153 = vmatprep.subr.mxu0 0.0
    %154 = vmatpush1.msra.mxu0 0.0
    %155 = vmatprep.subr.mxu0 0.0
    %156 = vmatpush1.msra.mxu0 0.0
    %157 = vmatprep.subr.mxu0 0.0
    %158 = vmatpush1.msra.mxu0 0.0
    %159 = vmatprep.subr.mxu0 0.0
    %160 = vmatpush1.msra.mxu0 0.0
    %161 = vmatprep.subr.mxu0 0.0
    %162 = vmatpush1.msra.mxu0 0.0
    %163 = vmatprep.subr.mxu0 0.0
    %164 = vmatpush1.msra.mxu0 0.0
    %165 = vmatprep.subr.mxu0 0.0
    %166 = vmatpush1.msra.mxu0 0.0
    %167 = vmatprep.subr.mxu0 0.0
    %168 = vmatpush1.msra.mxu0 0.0
    %169 = vmatprep.subr.mxu0 0.0
    %170 = vmatpush1.msra.mxu0 0.0
    %171 = vmatprep.mubr.f32.mxu0 0.0
    %172 = vmatmul.mubr.f32.gmra.mrb[0].mxu0 %v105
    %v173 = vpop.f32.mrb[0].mxu0
    %v174 = vadd.f32 %v101, %v173
    %v175 = vpop.f32.mrb[0].mxu0
    %176 = vdwg.mxu0
    %vm177 = vcmp.gt.f32.partialorder %v174, 0.0
    %v178 = vmul.f32 %v174, 0.2
    %v179 = vsel %vm177, %v174, %v178
    %v180 = vld [vmem:[#allocation8] sm:$0xff]
    %v181 = vld [vmem:[#allocation8 + $0x8] sm:$0xff]
    %v182 = vld [vmem:[#allocation8 + $0x10] sm:$0xff]
    %v183 = vld [vmem:[#allocation8 + $0x18] sm:$0xff]
    %v184 = vld [vmem:[#allocation8 + $0x20] sm:$0xff]
    %v185 = vld [vmem:[#allocation8 + $0x28] sm:$0xff]
    %v186 = vld [vmem:[#allocation8 + $0x30] sm:$0xff]
    %v187 = vld [vmem:[#allocation8 + $0x38] sm:$0xff]
    %v188 = vld [vmem:[#allocation8 + $0x40] sm:$0xff]
    %v189 = vld [vmem:[#allocation8 + $0x48] sm:$0xff]
    %v190 = vld [vmem:[#allocation8 + $0x50] sm:$0xff]
    %v191 = vld [vmem:[#allocation8 + $0x58] sm:$0xff]
    %v192 = vld [vmem:[#allocation8 + $0x60] sm:$0xff]
    %v193 = vld [vmem:[#allocation8 + $0x68] sm:$0xff]
    %v194 = vld [vmem:[#allocation8 + $0x70] sm:$0xff]
    %v195 = vld [vmem:[#allocation8 + $0x78] sm:$0xff]
    %v196 = vld [vmem:[%s4] sm:$0x1]
    %v198 = vlaneseq
    %v199 = vshrl.u32 %v198, 7
    %v200 = vsub.s32 0, %v199
    %v201 = vrot.slane %v196, %v200
    %203 = vmatprep.subr.mxu0 0.0
    %204 = vmatpush1.msra.mxu0 %v180
    %205 = vmatprep.subr.mxu0 0.0
    %206 = vmatpush1.msra.mxu0 %v181
    %207 = vmatprep.subr.mxu0 0.0
    %208 = vmatpush1.msra.mxu0 %v182
    %209 = vmatprep.subr.mxu0 0.0
    %210 = vmatpush1.msra.mxu0 %v183
    %211 = vmatprep.subr.mxu0 0.0
    %212 = vmatpush1.msra.mxu0 %v184
    %213 = vmatprep.subr.mxu0 0.0
    %214 = vmatpush1.msra.mxu0 %v185
    %215 = vmatprep.subr.mxu0 0.0
    %216 = vmatpush1.msra.mxu0 %v186
    %217 = vmatprep.subr.mxu0 0.0
    %218 = vmatpush1.msra.mxu0 %v187
    %219 = vmatprep.subr.mxu0 0.0
    %220 = vmatpush1.msra.mxu0 %v188
    %221 = vmatprep.subr.mxu0 0.0
    %222 = vmatpush1.msra.mxu0 %v189
    %223 = vmatprep.subr.mxu0 0.0
    %224 = vmatpush1.msra.mxu0 %v190
    %225 = vmatprep.subr.mxu0 0.0
    %226 = vmatpush1.msra.mxu0 %v191
    %227 = vmatprep.subr.mxu0 0.0
    %228 = vmatpush1.msra.mxu0 %v192
    %229 = vmatprep.subr.mxu0 0.0
    %230 = vmatpush1.msra.mxu0 %v193
    %231 = vmatprep.subr.mxu0 0.0
    %232 = vmatpush1.msra.mxu0 %v194
    %233 = vmatprep.subr.mxu0 0.0
    %234 = vmatpush1.msra.mxu0 %v195
    %235 = vmatprep.subr.mxu0 0.0
    %236 = vmatpush1.msra.mxu0 0.0
    %237 = vmatprep.subr.mxu0 0.0
    %238 = vmatpush1.msra.mxu0 0.0
    %239 = vmatprep.subr.mxu0 0.0
    %240 = vmatpush1.msra.mxu0 0.0
    %241 = vmatprep.subr.mxu0 0.0
    %242 = vmatpush1.msra.mxu0 0.0
    %243 = vmatprep.subr.mxu0 0.0
    %244 = vmatpush1.msra.mxu0 0.0
    %245 = vmatprep.subr.mxu0 0.0
    %246 = vmatpush1.msra.mxu0 0.0
    %247 = vmatprep.subr.mxu0 0.0
    %248 = vmatpush1.msra.mxu0 0.0
    %249 = vmatprep.subr.mxu0 0.0
    %250 = vmatpush1.msra.mxu0 0.0
    %251 = vmatprep.subr.mxu0 0.0
    %252 = vmatpush1.msra.mxu0 0.0
    %253 = vmatprep.subr.mxu0 0.0
    %254 = vmatpush1.msra.mxu0 0.0
    %255 = vmatprep.subr.mxu0 0.0
    %256 = vmatpush1.msra.mxu0 0.0
    %257 = vmatprep.subr.mxu0 0.0
    %258 = vmatpush1.msra.mxu0 0.0
    %259 = vmatprep.subr.mxu0 0.0
    %260 = vmatpush1.msra.mxu0 0.0
    %261 = vmatprep.subr.mxu0 0.0
    %262 = vmatpush1.msra.mxu0 0.0
    %263 = vmatprep.subr.mxu0 0.0
    %264 = vmatpush1.msra.mxu0 0.0
    %265 = vmatprep.subr.mxu0 0.0
    %266 = vmatpush1.msra.mxu0 0.0
    %267 = vmatprep.mubr.f32.mxu0 0.0
    %268 = vmatmul.mubr.f32.gmra.mrb[0].mxu0 %v179
    %v269 = vpop.f32.mrb[0].mxu0
    %v270 = vadd.f32 %v201, %v269
    %v271 = vpop.f32.mrb[0].mxu0
    %272 = vdwg.mxu0
    %vm273 = vcmp.gt.f32.partialorder %v270, 0.0
    %v274 = vmul.f32 %v270, 0.2
    %v275 = vsel %vm273, %v270, %v274
    %v276 = vld [vmem:[#allocation9] sm:$0xff]
    %v277 = vld [vmem:[#allocation9 + $0x8] sm:$0xff]
    %v278 = vld [vmem:[#allocation9 + $0x10] sm:$0xff]
    %v279 = vld [vmem:[#allocation9 + $0x18] sm:$0xff]
    %v280 = vld [vmem:[#allocation9 + $0x20] sm:$0xff]
    %v281 = vld [vmem:[#allocation9 + $0x28] sm:$0xff]
    %v282 = vld [vmem:[#allocation9 + $0x30] sm:$0xff]
    %v283 = vld [vmem:[#allocation9 + $0x38] sm:$0xff]
    %v284 = vld [vmem:[#allocation9 + $0x40] sm:$0xff]
    %v285 = vld [vmem:[#allocation9 + $0x48] sm:$0xff]
    %v286 = vld [vmem:[#allocation9 + $0x50] sm:$0xff]
    %v287 = vld [vmem:[#allocation9 + $0x58] sm:$0xff]
    %v288 = vld [vmem:[#allocation9 + $0x60] sm:$0xff]
    %v289 = vld [vmem:[#allocation9 + $0x68] sm:$0xff]
    %v290 = vld [vmem:[#allocation9 + $0x70] sm:$0xff]
    %v291 = vld [vmem:[#allocation9 + $0x78] sm:$0xff]
    %v292 = vld [vmem:[%s6] sm:$0x1]
    %v294 = vlaneseq
    %v295 = vshrl.u32 %v294, 7
    %v296 = vsub.s32 0, %v295
    %v297 = vrot.slane %v292, %v296
    %299 = vmatprep.subr.mxu0 0.0
    %300 = vmatpush1.msra.mxu0 %v276
    %301 = vmatprep.subr.mxu0 0.0
    %302 = vmatpush1.msra.mxu0 %v277
    %303 = vmatprep.subr.mxu0 0.0
    %304 = vmatpush1.msra.mxu0 %v278
    %305 = vmatprep.subr.mxu0 0.0
    %306 = vmatpush1.msra.mxu0 %v279
    %307 = vmatprep.subr.mxu0 0.0
    %308 = vmatpush1.msra.mxu0 %v280
    %309 = vmatprep.subr.mxu0 0.0
    %310 = vmatpush1.msra.mxu0 %v281
    %311 = vmatprep.subr.mxu0 0.0
    %312 = vmatpush1.msra.mxu0 %v282
    %313 = vmatprep.subr.mxu0 0.0
    %314 = vmatpush1.msra.mxu0 %v283
    %315 = vmatprep.subr.mxu0 0.0
    %316 = vmatpush1.msra.mxu0 %v284
    %317 = vmatprep.subr.mxu0 0.0
    %318 = vmatpush1.msra.mxu0 %v285
    %319 = vmatprep.subr.mxu0 0.0
    %320 = vmatpush1.msra.mxu0 %v286
    %321 = vmatprep.subr.mxu0 0.0
    %322 = vmatpush1.msra.mxu0 %v287
    %323 = vmatprep.subr.mxu0 0.0
    %324 = vmatpush1.msra.mxu0 %v288
    %325 = vmatprep.subr.mxu0 0.0
    %326 = vmatpush1.msra.mxu0 %v289
    %327 = vmatprep.subr.mxu0 0.0
    %328 = vmatpush1.msra.mxu0 %v290
    %329 = vmatprep.subr.mxu0 0.0
    %330 = vmatpush1.msra.mxu0 %v291
    %331 = vmatprep.subr.mxu0 0.0
    %332 = vmatpush1.msra.mxu0 0.0
    %333 = vmatprep.subr.mxu0 0.0
    %334 = vmatpush1.msra.mxu0 0.0
    %335 = vmatprep.subr.mxu0 0.0
    %336 = vmatpush1.msra.mxu0 0.0
    %337 = vmatprep.subr.mxu0 0.0
    %338 = vmatpush1.msra.mxu0 0.0
    %339 = vmatprep.subr.mxu0 0.0
    %340 = vmatpush1.msra.mxu0 0.0
    %341 = vmatprep.subr.mxu0 0.0
    %342 = vmatpush1.msra.mxu0 0.0
    %343 = vmatprep.subr.mxu0 0.0
    %344 = vmatpush1.msra.mxu0 0.0
    %345 = vmatprep.subr.mxu0 0.0
    %346 = vmatpush1.msra.mxu0 0.0
    %347 = vmatprep.subr.mxu0 0.0
    %348 = vmatpush1.msra.mxu0 0.0
    %349 = vmatprep.subr.mxu0 0.0
    %350 = vmatpush1.msra.mxu0 0.0
    %351 = vmatprep.subr.mxu0 0.0
    %352 = vmatpush1.msra.mxu0 0.0
    %353 = vmatprep.subr.mxu0 0.0
    %354 = vmatpush1.msra.mxu0 0.0
    %355 = vmatprep.subr.mxu0 0.0
    %356 = vmatpush1.msra.mxu0 0.0
    %357 = vmatprep.subr.mxu0 0.0
    %358 = vmatpush1.msra.mxu0 0.0
    %359 = vmatprep.subr.mxu0 0.0
    %360 = vmatpush1.msra.mxu0 0.0
    %361 = vmatprep.subr.mxu0 0.0
    %362 = vmatpush1.msra.mxu0 0.0
    %363 = vmatprep.mubr.f32.mxu0 0.0
    %364 = vmatmul.mubr.f32.gmra.mrb[0].mxu0 %v275
    %v365 = vpop.f32.mrb[0].mxu0
    %v366 = vadd.f32 %v297, %v365
    %v367 = vpop.f32.mrb[0].mxu0
    %368 = vdwg.mxu0
    %vm369 = vcmp.gt.f32.partialorder %v366, 0.0
    %v370 = vmul.f32 %v366, 0.2
    %v371 = vsel %vm369, %v366, %v370
    %v372 = vld [vmem:[%s7] sm:$0x1]
    %s373 = sld [smem:[#allocation2]]
    %v374 = vstv %s373
    %375 = vmatprep.subr.mxu0 0.0
    %376 = vmatpush1.xpose.msra.mxu0 %v371
    %377 = vmatprep.subr.mxu0 0.0
    %378 = vmatpush1.xpose.msra.mxu0 0.0
    %379 = vmatprep.subr.mxu0 0.0
    %380 = vmatpush1.xpose.msra.mxu0 0.0
    %381 = vmatprep.subr.mxu0 0.0
    %382 = vmatpush1.xpose.msra.mxu0 0.0
    %383 = vmatprep.subr.mxu0 0.0
    %384 = vmatpush1.xpose.msra.mxu0 0.0
    %385 = vmatprep.subr.mxu0 0.0
    %386 = vmatpush1.xpose.msra.mxu0 0.0
    %387 = vmatprep.subr.mxu0 0.0
    %388 = vmatpush1.xpose.msra.mxu0 0.0
    %389 = vmatprep.subr.mxu0 0.0
    %390 = vmatpush1.xpose.msra.mxu0 0.0
    %391 = vmatprep.subr.mxu0 0.0
    %392 = vmatpush1.xpose.msra.mxu0 0.0
    %393 = vmatprep.subr.mxu0 0.0
    %394 = vmatpush1.xpose.msra.mxu0 0.0
    %395 = vmatprep.subr.mxu0 0.0
    %396 = vmatpush1.xpose.msra.mxu0 0.0
    %397 = vmatprep.subr.mxu0 0.0
    %398 = vmatpush1.xpose.msra.mxu0 0.0
    %399 = vmatprep.subr.mxu0 0.0
    %400 = vmatpush1.xpose.msra.mxu0 0.0
    %401 = vmatprep.subr.mxu0 0.0
    %402 = vmatpush1.xpose.msra.mxu0 0.0
    %403 = vmatprep.subr.mxu0 0.0
    %404 = vmatpush1.xpose.msra.mxu0 0.0
    %405 = vmatprep.subr.mxu0 0.0
    %406 = vmatpush1.xpose.msra.mxu0 0.0
    %407 = vmatprep.subr.mxu0 0.0
    %408 = vmatpush1.xpose.msra.mxu0 0.0
    %409 = vmatprep.subr.mxu0 0.0
    %410 = vmatpush1.xpose.msra.mxu0 0.0
    %411 = vmatprep.subr.mxu0 0.0
    %412 = vmatpush1.xpose.msra.mxu0 0.0
    %413 = vmatprep.subr.mxu0 0.0
    %414 = vmatpush1.xpose.msra.mxu0 0.0
    %415 = vmatprep.subr.mxu0 0.0
    %416 = vmatpush1.xpose.msra.mxu0 0.0
    %417 = vmatprep.subr.mxu0 0.0
    %418 = vmatpush1.xpose.msra.mxu0 0.0
    %419 = vmatprep.subr.mxu0 0.0
    %420 = vmatpush1.xpose.msra.mxu0 0.0
    %421 = vmatprep.subr.mxu0 0.0
    %422 = vmatpush1.xpose.msra.mxu0 0.0
    %423 = vmatprep.subr.mxu0 0.0
    %424 = vmatpush1.xpose.msra.mxu0 0.0
    %425 = vmatprep.subr.mxu0 0.0
    %426 = vmatpush1.xpose.msra.mxu0 0.0
    %427 = vmatprep.subr.mxu0 0.0
    %428 = vmatpush1.xpose.msra.mxu0 0.0
    %429 = vmatprep.subr.mxu0 0.0
    %430 = vmatpush1.xpose.msra.mxu0 0.0
    %431 = vmatprep.subr.mxu0 0.0
    %432 = vmatpush1.xpose.msra.mxu0 0.0
    %433 = vmatprep.subr.mxu0 0.0
    %434 = vmatpush1.xpose.msra.mxu0 0.0
    %435 = vmatprep.subr.mxu0 0.0
    %436 = vmatpush1.xpose.msra.mxu0 0.0
    %437 = vmatprep.subr.mxu0 0.0
    %438 = vmatpush1.xpose.msra.mxu0 0.0
    %439 = vmatprep.mubr.f32.mxu0 0.0
    %440 = vmatmul.mubr.f32.gmra.mrb[0].mxu0 %v372
    %v441 = vpop.f32.mrb[0].mxu0
    %v442 = vadd.f32 %v374, %v441
    %v443 = vpop.f32.mrb[0].mxu0
    %444 = vdwg.mxu0
    %v445 = vxor.u32 %v442, 2147483648
    %v446 = vmul.f32 %v445, 1.442695
    %v447 = vpow.pop %v446
    %v448 = vadd.f32 %v447, 1.0
    %v449 = vrcp.pop %v448
    %v450 = vmul.f32 1.0, %v449
    %vm451 = vcmask 57344
    %452 = vst.msk [vmem:[#allocation11] sm:$0x1] %vm451, %v450
    // Predicated region
    $region54: #{discriminator_forward.1} parent=1 // pred_check
      _
    $region55: #{discriminator_forward.1} parent=1 // pred_check_branch
      %454 = sbr.rel (0) target = $region57
    $region56: #{discriminator_forward.1} parent=1 // pred_region
      %s456 = ssub.s32 16, 16
      %457 = vsyncadd [#allocation5], %s456
      %s459 = sshll.u32 [#allocation11], 4
      %s460 = int_to_ptr.vmem [resolvable:$true] %s459
      %462 = dma.vmem_to_hbm [thread:$0]  %s460, 16, %s9, [#allocation5]
    $region57: #{discriminator_forward.1} parent=1 // pred_fallthru
      _
    // Predicated region
    $region58: #{discriminator_forward.1} parent=1 // pred_check
      _
    $region59: #{discriminator_forward.1} parent=1 // pred_check_branch
      %464 = sbr.rel (0) target = $region61
    $region60: #{discriminator_forward.1} parent=1 // pred_region
      %465 = dma.done [#allocation5], 16
    $region61: #{discriminator_forward.1} parent=1 // pred_fallthru
      _
    %466 = vsyncpa [#allocation4], 1
    %467 = vsyncpa [#allocation7], 1
    %468 = vsyncpa [#allocation10], 1
    %469 = vsyncpa [#allocation5], 1

</llo_original>
